<compile_context>
chip_gen: v6e
topology: v6e:2x2x1
jax: 0.10.0
libtpu: 0.0.40
codegen_flags: <defaults>
</compile_context>

<pallas_src>
import math
import functools

import jax
import jax.numpy as jnp
from jax.experimental import pallas as pl
from jax.experimental.pallas import tpu as pltpu


_LANE = 128
_VMEM_LIMIT_BYTES = 48 * 1024 * 1024   # scoped VMEM limit: safe on v5e/v6e (128 MiB) and v7x (64 MiB)
_VMEM_TILE_BUDGET = 32 * 1024 * 1024   # all double-buffered tiles together stay under this


def build_sinusoidal_pe(max_len: int, dim: int) -> jnp.ndarray:
    """Deterministic buffer identical to the PyTorch __init__: shape (max_len, 1, dim)."""
    if dim % 2 != 0:
        raise ValueError(f"Cannot use sin/cos positional encoding with odd dim (got dim={dim})")
    position = jnp.arange(0, max_len, dtype=jnp.float32)[:, None]              # (L, 1)
    div_term = jnp.exp(
        jnp.arange(0, dim, 2, dtype=jnp.float32) * -(math.log(10000.0) / dim)
    )                                                                           # (D/2,)
    angles = position * div_term                                                # (L, D/2)
    pe = jnp.zeros((max_len, dim), dtype=jnp.float32)
    pe = pe.at[:, 0::2].set(jnp.sin(angles))
    pe = pe.at[:, 1::2].set(jnp.cos(angles))
    return pe[:, None, :]                                                       # (L, 1, D)


def _pe_sum_kernel(emb_ref, pe_ref, out_ref, *, scale):
    # Either:  emb/out (tile_s, B, D) with pe (tile_s, 1, D)  -> sublane broadcast over B
    # or:      emb/out/pe all (tile_s, D)                     -> plain elementwise
    x = emb_ref[...].astype(jnp.float32) * scale + pe_ref[...].astype(jnp.float32)
    out_ref[...] = x.astype(out_ref.dtype)


def _ceil_to(x: int, m: int) -> int:
    return -(-x // m) * m


def _sublane_mult(dtype) -> int:
    # Sub-32-bit dtypes pack along sublanes: f32 -> 8 rows, bf16 -> 16, int8/fp8 -> 32.
    return max(8, 32 // jnp.dtype(dtype).itemsize)


def _pick_tile_s(S: int, bytes_per_seq_row: int, mult: int) -> int:
    """Largest seq-tile whose double-buffered working set fits the VMEM budget."""
    tile_s = max(mult, _VMEM_TILE_BUDGET // max(bytes_per_seq_row, 1))
    if tile_s >= S:
        if S >= 2 * max(8, mult):
            # Split the seq axis so v7x's two TensorCores both get a parallel tile.
            tile_s = _ceil_to(-(-S // 2), mult)
        else:
            return S
    tile_s = max(mult, (tile_s // mult) * mult)
    return min(tile_s, S)


def positional_encoding_sum(emb: jnp.ndarray, pe: jnp.ndarray, dim: int,
                            tile_s: int | None = None) -> jnp.ndarray:
    """emb: (S, B, D); pe: (max_len, 1, D) float32. Returns (S, B, D) in emb.dtype."""
    S, B, D = emb.shape
    if D != dim:
        raise ValueError(f"emb last dim {D} != dim {dim}")
    max_len = pe.shape[0]
    if S > max_len:
        raise ValueError(f"sequence length {S} exceeds max_len {max_len}")

    dtype = emb.dtype
    itemsize = jnp.dtype(dtype).itemsize
    sub = _sublane_mult(dtype)
    d_pad = _ceil_to(D, _LANE)
    scale = float(math.sqrt(dim))
    kernel = functools.partial(_pe_sum_kernel, scale=scale)

    # Ship pe in the I/O dtype (halves the pe stream for bf16 I/O); compute stays f32.
    pe_slab = pe[:S].astype(dtype)                                  # (S, 1, D)

    cparams = pltpu.CompilerParams(
        dimension_semantics=("parallel",),
        vmem_limit_bytes=_VMEM_LIMIT_BYTES,
    )

    if B == 1:
        # Fully lane/sublane-dense 2D path; (S, 1, D) <-> (S, D) reshapes are free.
        emb2 = emb.reshape(S, D)
        pe2 = pe_slab.reshape(S, D)
        if tile_s is None:
            row_bytes = 2 * 3 * d_pad * itemsize                    # emb+out+pe, double-buffered
            tile_s = _pick_tile_s(S, row_bytes, sub)
        if tile_s != S and tile_s % sub != 0:
            raise ValueError(f"tile_s must be a multiple of {sub} or equal to S")
        n_s = pl.cdiv(S, tile_s)
        out2 = pl.pallas_call(
            kernel,
            out_shape=jax.ShapeDtypeStruct((S, D), dtype),
            grid_spec=pl.GridSpec(
                grid=(n_s,),
                in_specs=[
                    pl.BlockSpec((tile_s, D), lambda i: (i, 0)),     # emb tile
                    pl.BlockSpec((tile_s, D), lambda i: (i, 0)),     # pe tile
                ],
                out_specs=pl.BlockSpec((tile_s, D), lambda i: (i, 0)),
            ),
            compiler_params=cparams,
        )(emb2, pe2)
        return out2.reshape(S, B, D)

    # Batch folded into the block: original (S, B, D) layout, grid over seq tiles only.
    if tile_s is None:
        b_pad = _ceil_to(B, sub)
        row_bytes = 2 * ((2 * b_pad + sub) * d_pad * itemsize)       # emb+out+pe, double-buffered, padded
        tile_s = _pick_tile_s(S, row_bytes, 1)                       # seq is a major dim: any granularity
    n_s = pl.cdiv(S, tile_s)                                         # ragged tail handled by edge masking
    return pl.pallas_call(
        kernel,
        out_shape=jax.ShapeDtypeStruct((S, B, D), dtype),
        grid_spec=pl.GridSpec(
            grid=(n_s,),
            in_specs=[
                pl.BlockSpec((tile_s, B, D), lambda i: (i, 0, 0)),   # emb tile (full batch, contiguous DMA)
                pl.BlockSpec((tile_s, 1, D), lambda i: (i, 0, 0)),   # pe tile, once per seq tile
            ],
            out_specs=pl.BlockSpec((tile_s, B, D), lambda i: (i, 0, 0)),
        ),
        compiler_params=cparams,
    )(emb, pe_slab)


def _reference(emb, pe, dim):
    S = emb.shape[0]
    out = emb.astype(jnp.float32) * math.sqrt(dim) + pe[:S].astype(jnp.float32)
    return out.astype(emb.dtype)


if __name__ == "__main__":
    key = jax.random.PRNGKey(0)

    def check(emb, pe, dim, tile_s=None, tol=1e-5):
        out = jax.block_until_ready(positional_encoding_sum(emb, pe, dim, tile_s=tile_s))
        ref = _reference(emb, pe, dim)
        assert out.shape == emb.shape and out.dtype == emb.dtype
        assert jnp.allclose(out.astype(jnp.float32), ref.astype(jnp.float32),
                            atol=tol, rtol=tol), f"mismatch shape={emb.shape} dtype={emb.dtype}"

    # 1) small demo shape implied by forward(): (seq=8, batch=2, dim=32), f32
    D = 32
    pe = build_sinusoidal_pe(64, D)
    emb = jax.random.normal(key, (8, 2, D), dtype=jnp.float32)
    check(emb, pe, D)

    # 2) multi-tile grid with a ragged seq tail (explicit tile_s)
    emb2 = jax.random.normal(jax.random.fold_in(key, 1), (20, 2, D), dtype=jnp.float32)
    check(emb2, pe, D, tile_s=8)

    # 3) typical shape: batch folded into the block, seq auto-split into 2 parallel tiles
    D3 = 256
    pe3 = build_sinusoidal_pe(256, D3)
    emb3 = jax.random.normal(jax.random.fold_in(key, 2), (128, 8, D3), dtype=jnp.float32)
    check(emb3, pe3, D3)

    # 4) B == 1 lane/sublane-dense 2D path
    D4 = 128
    pe4 = build_sinusoidal_pe(128, D4)
    emb4 = jax.random.normal(jax.random.fold_in(key, 3), (64, 1, D4), dtype=jnp.float32)
    check(emb4, pe4, D4)

    # 5) bf16 I/O path (bf16 emb/out/pe streams, f32 compute in-kernel)
    emb5 = emb3.astype(jnp.bfloat16)
    check(emb5, pe3, D3, tol=5e-2)

    print("KERNEL_OK")
</pallas_src>

<mosaic_0001>
module attributes {stable_mosaic.version = 11 : i64} {
  func.func @_pe_sum_kernel(%arg0: i32, %arg1: memref<8x2x32xf32, #tpu.memory_space<vmem>>, %arg2: memref<8x1x32xf32, #tpu.memory_space<vmem>>, %arg3: memref<8x2x32xf32, #tpu.memory_space<vmem>>) attributes {dimension_semantics = [#tpu.dimension_semantics<parallel>], iteration_bounds = array<i64: 1>, scalar_prefetch = 0 : i64, scratch_operands = 0 : i64, tpu.core_type = #tpu.core_type<tc>, window_params = [{transform_indices = @transform_0, window_bounds = array<i64: 8, 2, 32>}, {transform_indices = @transform_1, window_bounds = array<i64: 8, 1, 32>}, {transform_indices = @transform_2, window_bounds = array<i64: 8, 2, 32>}]} {
    %c0 = arith.constant 0 : index
    %c0_0 = arith.constant 0 : index
    %c0_1 = arith.constant 0 : index
    %0 = vector.load %arg1[%c0, %c0_0, %c0_1] : memref<8x2x32xf32, #tpu.memory_space<vmem>>, vector<8x2x32xf32>
    %cst = arith.constant 5.65685415 : f32
    %1 = vector.broadcast %cst : f32 to vector<8x2x32xf32>
    %2 = arith.mulf %0, %1 : vector<8x2x32xf32>
    %c0_2 = arith.constant 0 : index
    %c0_3 = arith.constant 0 : index
    %c0_4 = arith.constant 0 : index
    %3 = vector.load %arg2[%c0_2, %c0_3, %c0_4] : memref<8x1x32xf32, #tpu.memory_space<vmem>>, vector<8x1x32xf32>
    %4 = vector.broadcast %3 : vector<8x1x32xf32> to vector<8x2x32xf32>
    %5 = arith.addf %2, %4 : vector<8x2x32xf32>
    %c0_5 = arith.constant 0 : index
    %c0_6 = arith.constant 0 : index
    %c0_7 = arith.constant 0 : index
    %6 = vector.load %arg3[%c0_5, %c0_6, %c0_7] : memref<8x2x32xf32, #tpu.memory_space<vmem>>, vector<8x2x32xf32>
    tpu.vector_store %arg3[%c0_5, %c0_6, %c0_7], %5 {strides = array<i32>} : memref<8x2x32xf32, #tpu.memory_space<vmem>>, vector<8x2x32xf32>,
    return
  }
  func.func @transform_0(%arg0: i32) -> (i32, i32, i32) {
    %c0_i32 = arith.constant 0 : i32
    %c0_i32_0 = arith.constant 0 : i32
    %c0_i32_1 = arith.constant 0 : i32
    return %arg0, %c0_i32, %c0_i32_0 : i32, i32, i32
  }
  func.func @transform_1(%arg0: i32) -> (i32, i32, i32) {
    %c0_i32 = arith.constant 0 : i32
    %c0_i32_0 = arith.constant 0 : i32
    %c0_i32_1 = arith.constant 0 : i32
    return %arg0, %c0_i32, %c0_i32_0 : i32, i32, i32
  }
  func.func @transform_2(%arg0: i32) -> (i32, i32, i32) {
    %c0_i32 = arith.constant 0 : i32
    %c0_i32_0 = arith.constant 0 : i32
    %c0_i32_1 = arith.constant 0 : i32
    return %arg0, %c0_i32, %c0_i32_0 : i32, i32, i32
  }
}

</mosaic_0001>

<llo_original>
// kernel: tpu_custom_call.1
$region0: #{tpu_custom_call.1}
  #allocation0 [shape = 'u32[]', space=smem, size = 0x4, offset = 0x4, fixed_abs, tag = 'smem constant byte address 0x4 - core index']
  #allocation1 [shape = 'u32[144,128]{1,0:T(1,128)}', space=vmem, size = 0x12000, scoped, tag = 'internal scratch']
  %s0 = inlined_call_operand.hbm [shape: f32[8,2,32], index: 0, kind: input, shape index: {}]
  %s1 = inlined_call_operand.hbm [shape: f32[8,1,32], index: 1, kind: input, shape index: {}]
  %s2 = inlined_call_operand.hbm [shape: f32[8,2,32], index: 2, kind: output, shape index: {}]
  %s3 = sld [smem:[#allocation0]]
  $region26: #{tpu_custom_call.1} parent=0
    _
  %s5 = ssub.s32 1, %s3
  %s6 = scalar_select 0, %s5, %s3
  $region1: #{tpu_custom_call.1} parent=0
    #allocation2 [shape = 'u8[8192]{0}', space=vmem, size = 0x2000, scoped, tag = 'input window, operand 0, single buffered']
    #allocation3 [shape = 's32[1]{0}', space=sflag, size = 0x4, scoped, tag = 'scoped memory for tpu_custom_call.1']
    #allocation4 [shape = 's32[1]{0}', space=sflag, size = 0x4, scoped, tag = 'scoped memory for tpu_custom_call.1']
    #allocation5 [shape = 'u8[4096]{0}', space=vmem, size = 0x1000, scoped, tag = 'input window, operand 1, single buffered']
    #allocation6 [shape = 's32[1]{0}', space=sflag, size = 0x4, scoped, tag = 'scoped memory for tpu_custom_call.1']
    #allocation7 [shape = 'u8[8192]{0}', space=vmem, size = 0x2000, scoped, tag = 'output window, operand 0, single buffered']
    %7 = vsyncpa [#allocation3], 0
    %8 = vsyncpa [#allocation6], 0
    %9 = vsyncpa [#allocation4], 0
    // Predicated region
    $region2: #{tpu_custom_call.1} parent=1 // pred_check
      _
    $region3: #{tpu_custom_call.1} parent=1 // pred_check_branch
      %11 = sbr.rel (0) target = $region5
    $region4: #{tpu_custom_call.1} parent=1 // pred_region
      %s13 = ssub.s32 256, 256
      %14 = vsyncadd [#allocation3], %s13
      %s15 = sshll.u32 [#allocation2], 4
      %s16 = int_to_ptr.vmem [resolvable:$true] %s15
      %21 = dma.hbm_to_vmem [thread:$0]  %s0, 256, %s16, [#allocation3], 32, 32, 2
    $region5: #{tpu_custom_call.1} parent=1 // pred_fallthru
      _
    // Predicated region
    $region6: #{tpu_custom_call.1} parent=1 // pred_check
      _
    $region7: #{tpu_custom_call.1} parent=1 // pred_check_branch
      %23 = sbr.rel (0) target = $region9
    $region8: #{tpu_custom_call.1} parent=1 // pred_region
      %s25 = ssub.s32 128, 128
      %26 = vsyncadd [#allocation6], %s25
      %s27 = sshll.u32 [#allocation5], 4
      %s28 = int_to_ptr.vmem [resolvable:$true] %s27
      %33 = dma.hbm_to_vmem [thread:$0]  %s1, 128, %s28, [#allocation6], 16, 16, 1
    $region9: #{tpu_custom_call.1} parent=1 // pred_fallthru
      _
    // Predicated region
    $region10: #{tpu_custom_call.1} parent=1 // pred_check
      _
    $region11: #{tpu_custom_call.1} parent=1 // pred_check_branch
      %35 = sbr.rel (0) target = $region13
    $region12: #{tpu_custom_call.1} parent=1 // pred_region
      %36 = dma.done [#allocation3], 256
    $region13: #{tpu_custom_call.1} parent=1 // pred_fallthru
      _
    // Predicated region
    $region14: #{tpu_custom_call.1} parent=1 // pred_check
      _
    $region15: #{tpu_custom_call.1} parent=1 // pred_check_branch
      %38 = sbr.rel (0) target = $region17
    $region16: #{tpu_custom_call.1} parent=1 // pred_region
      %39 = dma.done [#allocation6], 128
    $region17: #{tpu_custom_call.1} parent=1 // pred_fallthru
      _
    %v40 = vld [vmem:[#allocation2] sm:$0x3]
    %v41 = vld [vmem:[#allocation2 + $0x2] sm:$0x3]
    %v42 = vld [vmem:[#allocation2 + $0x4] sm:$0x3]
    %v43 = vld [vmem:[#allocation2 + $0x6] sm:$0x3]
    %v44 = vld [vmem:[#allocation2 + $0x8] sm:$0x3]
    %v45 = vld [vmem:[#allocation2 + $0xa] sm:$0x3]
    %v46 = vld [vmem:[#allocation2 + $0xc] sm:$0x3]
    %v47 = vld [vmem:[#allocation2 + $0xe] sm:$0x3]
    %v48 = vmul.f32 %v40, 5.656854
    %v49 = vmul.f32 %v41, 5.656854
    %v50 = vmul.f32 %v42, 5.656854
    %v51 = vmul.f32 %v43, 5.656854
    %v52 = vmul.f32 %v44, 5.656854
    %v53 = vmul.f32 %v45, 5.656854
    %v54 = vmul.f32 %v46, 5.656854
    %v55 = vmul.f32 %v47, 5.656854
    %v56 = vld [vmem:[#allocation5] sm:$0x1]
    %v57 = vld [vmem:[#allocation5 + $0x1] sm:$0x1]
    %v58 = vld [vmem:[#allocation5 + $0x2] sm:$0x1]
    %v59 = vld [vmem:[#allocation5 + $0x3] sm:$0x1]
    %v60 = vld [vmem:[#allocation5 + $0x4] sm:$0x1]
    %v61 = vld [vmem:[#allocation5 + $0x5] sm:$0x1]
    %v62 = vld [vmem:[#allocation5 + $0x6] sm:$0x1]
    %v63 = vld [vmem:[#allocation5 + $0x7] sm:$0x1]
    %v72 = vlaneseq
    %v73 = vshrl.u32 %v72, 7
    %v74 = vsub.s32 0, %v73
    %v75 = vrot.slane %v56, %v74
    %v76 = vlaneseq
    %v77 = vshrl.u32 %v76, 7
    %v78 = vsub.s32 0, %v77
    %v79 = vrot.slane %v57, %v78
    %v80 = vlaneseq
    %v81 = vshrl.u32 %v80, 7
    %v82 = vsub.s32 0, %v81
    %v83 = vrot.slane %v58, %v82
    %v84 = vlaneseq
    %v85 = vshrl.u32 %v84, 7
    %v86 = vsub.s32 0, %v85
    %v87 = vrot.slane %v59, %v86
    %v88 = vlaneseq
    %v89 = vshrl.u32 %v88, 7
    %v90 = vsub.s32 0, %v89
    %v91 = vrot.slane %v60, %v90
    %v92 = vlaneseq
    %v93 = vshrl.u32 %v92, 7
    %v94 = vsub.s32 0, %v93
    %v95 = vrot.slane %v61, %v94
    %v96 = vlaneseq
    %v97 = vshrl.u32 %v96, 7
    %v98 = vsub.s32 0, %v97
    %v99 = vrot.slane %v62, %v98
    %v100 = vlaneseq
    %v101 = vshrl.u32 %v100, 7
    %v102 = vsub.s32 0, %v101
    %v103 = vrot.slane %v63, %v102
    %v112 = vadd.f32 %v48, %v75
    %v113 = vadd.f32 %v49, %v79
    %v114 = vadd.f32 %v50, %v83
    %v115 = vadd.f32 %v51, %v87
    %v116 = vadd.f32 %v52, %v91
    %v117 = vadd.f32 %v53, %v95
    %v118 = vadd.f32 %v54, %v99
    %v119 = vadd.f32 %v55, %v103
    %vm120 = vcmask 254976
    %121 = vst.msk [vmem:[#allocation7] sm:$0x3] %vm120, %v112
    %122 = vst.msk [vmem:[#allocation7 + $0x2] sm:$0x3] %vm120, %v113
    %123 = vst.msk [vmem:[#allocation7 + $0x4] sm:$0x3] %vm120, %v114
    %124 = vst.msk [vmem:[#allocation7 + $0x6] sm:$0x3] %vm120, %v115
    %125 = vst.msk [vmem:[#allocation7 + $0x8] sm:$0x3] %vm120, %v116
    %126 = vst.msk [vmem:[#allocation7 + $0xa] sm:$0x3] %vm120, %v117
    %127 = vst.msk [vmem:[#allocation7 + $0xc] sm:$0x3] %vm120, %v118
    %128 = vst.msk [vmem:[#allocation7 + $0xe] sm:$0x3] %vm120, %v119
    // Predicated region
    $region18: #{tpu_custom_call.1} parent=1 // pred_check
      _
    $region19: #{tpu_custom_call.1} parent=1 // pred_check_branch
      %130 = sbr.rel (0) target = $region21
    $region20: #{tpu_custom_call.1} parent=1 // pred_region
      %s132 = ssub.s32 256, 256
      %133 = vsyncadd [#allocation4], %s132
      %s134 = sshll.u32 [#allocation7], 4
      %s135 = int_to_ptr.vmem [resolvable:$true] %s134
      %140 = dma.vmem_to_hbm [thread:$0]  %s135, 256, %s2, [#allocation4], 32, 32, 2
    $region21: #{tpu_custom_call.1} parent=1 // pred_fallthru
      _
    // Predicated region
    $region22: #{tpu_custom_call.1} parent=1 // pred_check
      _
    $region23: #{tpu_custom_call.1} parent=1 // pred_check_branch
      %142 = sbr.rel (0) target = $region25
    $region24: #{tpu_custom_call.1} parent=1 // pred_region
      %143 = dma.done [#allocation4], 256
    $region25: #{tpu_custom_call.1} parent=1 // pred_fallthru
      _
    %144 = vsyncpa [#allocation3], 1
    %145 = vsyncpa [#allocation6], 1
    %146 = vsyncpa [#allocation4], 1

</llo_original>
